<compile_context>
chip_gen: v5e
topology: v5e:2x2
jax: 0.10.0
libtpu: 0.0.40
codegen_flags: <defaults>
</compile_context>

<pallas_src>
import jax
import jax.numpy as jnp
from jax.experimental import pallas as pl
from jax.experimental.pallas import tpu as pltpu


# ---------------------------------------------------------------------------
# math helpers
# ---------------------------------------------------------------------------
def _gelu_tanh(x):
    # 0.5 * x * (1 + tanh(sqrt(2/pi) * (x + 0.044715 * x^3))) — matches the
    # PyTorch GELU module in the spec (tanh approximation), computed in f32.
    c = jnp.sqrt(jnp.float32(2.0 / jnp.pi))
    return 0.5 * x * (1.0 + jnp.tanh(c * (x + 0.044715 * (x * x * x))))


def _round_up(n, m):
    return ((n + m - 1) // m) * m


# ---------------------------------------------------------------------------
# kernel
# ---------------------------------------------------------------------------
def _ff_kernel(x_ref, w1_ref, b1_ref, w2_ref, b2_ref, o_ref, acc_ref):
    """One (row-tile, hidden-tile) step of the GELU-MLP with f32 accumulation.

    x_ref is already bf16 (cast once in the wrapper), weights are bf16, bias /
    GELU / accumulator are f32.
    """
    h = pl.program_id(1)
    last = pl.num_programs(1) - 1

    # First matmul: (tm, D) @ (D, th) on the MXU, bf16 operands, f32 result.
    h1 = jnp.dot(x_ref[...], w1_ref[...], preferred_element_type=jnp.float32)
    h1 = h1 + b1_ref[...]            # bias + GELU stay in f32 (v5e-safe)
    g = _gelu_tanh(h1)

    # Second matmul: (tm, th) @ (th, D), accumulated over hidden tiles.
    partial = jnp.dot(g.astype(jnp.bfloat16), w2_ref[...],
                      preferred_element_type=jnp.float32)

    @pl.when(h == 0)
    def _():
        acc_ref[...] = partial       # write directly, no zero-fill + add

    @pl.when(h > 0)
    def _():
        acc_ref[...] += partial

    @pl.when(h == last)
    def _():
        o_ref[...] = (acc_ref[...] + b2_ref[...]).astype(o_ref.dtype)


# ---------------------------------------------------------------------------
# tile planning (VMEM- and generation-aware)
# ---------------------------------------------------------------------------
def _vmem_capacity_bytes():
    try:
        return int(pltpu.get_tpu_info().vmem_capacity_bytes)
    except Exception:
        return 64 * 1024 * 1024      # conservative: v7x per-TC capacity


def _plan_hidden_tile(h4):
    """Pick the hidden tile th (lane dim of W1, sublane dim of W2) and padded H4."""
    if h4 < 128:
        return h4, h4                           # full, unpadded hidden dim
    if h4 <= 512:
        th = _round_up(h4, 128)
        return th, th
    for cand in (512, 256, 128):                # prefer 256-multiples (v6e/v7x MXU)
        if h4 % cand == 0:
            return cand, h4
    th = 512
    return th, _round_up(h4, th)


def _plan_row_tile(m, d, th, x_item, out_item, vmem_budget, row_target):
    """Pick row tile tm (sized against VMEM) and padded M."""
    # Per-step VMEM: double-buffered x + out, f32 acc (scale with tm), plus the
    # two double-buffered bf16 weight tiles (fixed in tm).
    weight_bytes = 2 * 2 * (d * th * 2)                       # W1 + W2, bf16, x2 buffers
    per_row = d * (2 * x_item + 2 * out_item + 4)             # x dbuf + out dbuf + acc
    avail = max(vmem_budget - weight_bytes, per_row * 8)
    tm_cap = max(8, avail // per_row)

    align = 8
    for cand in (256, 128, 8):                                # 256-align for v6e/v7x MXU
        if m >= cand and tm_cap >= cand:
            align = cand
            break

    tm = min(row_target, tm_cap, _round_up(m, align))
    tm = max(align, (tm // align) * align)

    # Keep >= 2 row tiles when M allows: v7x has 2 TensorCores sharing the
    # "parallel" axis, a single row tile would idle one of them.
    if m >= 2 * align:
        tm = max(align, min(tm, _round_up(pl.cdiv(m, 2), align)))

    mp = _round_up(m, tm)
    return tm, mp


# ---------------------------------------------------------------------------
# wrapper
# ---------------------------------------------------------------------------
def feedforward(x, params, *, row_tile=1024):
    """x: (..., D) float array.  params: w1 (D,4D), b1 (1,4D), w2 (4D,D), b2 (1,D)."""
    d = x.shape[-1]
    h4 = params["w1"].shape[1]
    lead_shape = x.shape[:-1]
    m = 1
    for s in lead_shape:
        m *= s

    out_dtype = x.dtype
    out_item = jnp.dtype(out_dtype).itemsize

    vmem_cap = _vmem_capacity_bytes()
    vmem_budget = int(vmem_cap * 0.70)          # tile-planning budget (headroom left)
    vmem_limit = int(vmem_cap * 0.85)           # scoped-VMEM limit for this kernel

    th, h4p = _plan_hidden_tile(h4)
    tm, mp = _plan_row_tile(m, d, th, x_item=2, out_item=out_item,
                            vmem_budget=vmem_budget, row_target=row_tile)
    grid = (mp // tm, h4p // th)

    # Ship x and weights in bf16 (MXU operands), biases in f32.
    x2 = x.reshape(m, d).astype(jnp.bfloat16)
    if mp > m:
        x2 = jnp.pad(x2, ((0, mp - m), (0, 0)))

    w1 = params["w1"].astype(jnp.bfloat16)
    w2 = params["w2"].astype(jnp.bfloat16)
    b1 = params["b1"].reshape(1, h4).astype(jnp.float32)
    b2 = params["b2"].reshape(1, d).astype(jnp.float32)
    if h4p > h4:
        # Zero-padded hidden columns/rows are inert: padded W2 rows are zero, so
        # whatever GELU produces for the padded hidden lanes contributes nothing.
        w1 = jnp.pad(w1, ((0, 0), (0, h4p - h4)))
        b1 = jnp.pad(b1, ((0, 0), (0, h4p - h4)))
        w2 = jnp.pad(w2, ((0, h4p - h4), (0, 0)))

    grid_m = grid[0]
    cost = pl.CostEstimate(
        flops=4 * m * d * h4,                       # two matmuls
        transcendentals=m * h4,                     # tanh in GELU
        bytes_accessed=(x2.size * 2                                  # x (bf16)
                        + grid_m * (w1.size * 2 + w2.size * 2)       # weights re-streamed per row tile
                        + b1.size * 4 + b2.size * 4
                        + mp * d * out_item),                        # output
    )

    out = pl.pallas_call(
        _ff_kernel,
        out_shape=jax.ShapeDtypeStruct((mp, d), out_dtype),
        grid_spec=pltpu.PrefetchScalarGridSpec(
            num_scalar_prefetch=0,
            grid=grid,
            in_specs=[
                pl.BlockSpec((tm, d), lambda i, h: (i, 0)),   # x rows (resident over h)
                pl.BlockSpec((d, th), lambda i, h: (0, h)),   # W1 hidden tile
                pl.BlockSpec((1, th), lambda i, h: (0, h)),   # b1 hidden tile
                pl.BlockSpec((th, d), lambda i, h: (h, 0)),   # W2 hidden tile
                pl.BlockSpec((1, d), lambda i, h: (0, 0)),    # b2
            ],
            out_specs=pl.BlockSpec((tm, d), lambda i, h: (i, 0)),
            scratch_shapes=[pltpu.VMEM((tm, d), jnp.float32)],
        ),
        compiler_params=pltpu.CompilerParams(
            dimension_semantics=("parallel", "arbitrary"),
            vmem_limit_bytes=vmem_limit),
        cost_estimate=cost,
    )(x2, w1, b1, w2, b2)

    if mp > m:
        out = out[:m]
    return out.reshape(*lead_shape, d)


# ---------------------------------------------------------------------------
# references
# ---------------------------------------------------------------------------
def feedforward_ref(x, params):
    """Pure-JAX reference mirroring the kernel's bf16-operand / f32-acc matmuls."""
    w1 = params["w1"].astype(jnp.bfloat16)
    w2 = params["w2"].astype(jnp.bfloat16)
    h = jnp.dot(x.astype(jnp.bfloat16), w1,
                preferred_element_type=jnp.float32) + params["b1"]
    g = _gelu_tanh(h)
    out = jnp.dot(g.astype(jnp.bfloat16), w2,
                  preferred_element_type=jnp.float32) + params["b2"]
    return out.astype(x.dtype)


def feedforward_ref_f32(x, params):
    """Pure f32 reference of the PyTorch module (semantic check, looser tol)."""
    h = x @ params["w1"] + params["b1"]
    g = _gelu_tanh(h)
    return g @ params["w2"] + params["b2"]


# ---------------------------------------------------------------------------
# self-test
# ---------------------------------------------------------------------------
if __name__ == "__main__":
    # Small config consistent with the module: emb_dim=32 -> hidden 128,
    # batch=2, seq=8.
    B, T, D = 2, 8, 32
    H4 = 4 * D

    key = jax.random.PRNGKey(0)
    k0, k1, k2, k3, k4 = jax.random.split(key, 5)
    std = 0.02
    params = {
        "w1": jax.random.normal(k0, (D, H4), jnp.float32) * std,
        "b1": jax.random.normal(k1, (1, H4), jnp.float32) * std,
        "w2": jax.random.normal(k2, (H4, D), jnp.float32) * std,
        "b2": jax.random.normal(k3, (1, D), jnp.float32) * std,
    }
    x = jax.random.normal(k4, (B, T, D), jnp.float32)

    out = feedforward(x, params)
    out = jax.block_until_ready(out)
    assert out.shape == (B, T, D)

    # Strict check against a reference doing the same bf16-in / f32-acc matmuls.
    ref = feedforward_ref(x, params)
    assert jnp.allclose(out, ref, atol=1e-3, rtol=1e-3), "mismatch vs bf16 reference"

    # Looser semantic check against the pure-f32 PyTorch-equivalent forward.
    ref32 = feedforward_ref_f32(x, params)
    assert jnp.allclose(out, ref32, atol=2e-2, rtol=2e-2), "mismatch vs f32 reference"

    print("KERNEL_OK")
</pallas_src>

<mosaic_0001>
module attributes {stable_mosaic.version = 11 : i64} {
  func.func @_ff_kernel(%arg0: i32, %arg1: i32, %arg2: memref<8x32xbf16, #tpu.memory_space<vmem>>, %arg3: memref<32x128xbf16, #tpu.memory_space<vmem>>, %arg4: memref<1x128xf32, #tpu.memory_space<vmem>>, %arg5: memref<128x32xbf16, #tpu.memory_space<vmem>>, %arg6: memref<1x32xf32, #tpu.memory_space<vmem>>, %arg7: memref<8x32xf32, #tpu.memory_space<vmem>>, %arg8: memref<8x32xf32, #tpu.memory_space<vmem>>) attributes {dimension_semantics = [#tpu.dimension_semantics<parallel>, #tpu.dimension_semantics<arbitrary>], iteration_bounds = array<i64: 2, 1>, scalar_prefetch = 0 : i64, scratch_operands = 1 : i64, tpu.core_type = #tpu.core_type<tc>, window_params = [{transform_indices = @transform_0, window_bounds = array<i64: 8, 32>}, {transform_indices = @transform_1, window_bounds = array<i64: 32, 128>}, {transform_indices = @transform_2, window_bounds = array<i64: 1, 128>}, {transform_indices = @transform_3, window_bounds = array<i64: 128, 32>}, {pipeline_mode = #tpu.pipeline_mode<synchronous>, transform_indices = @transform_4, window_bounds = array<i64: 1, 32>}, {transform_indices = @transform_5, window_bounds = array<i64: 8, 32>}]} {
    %c0 = arith.constant 0 : index
    %c0_0 = arith.constant 0 : index
    %0 = vector.load %arg2[%c0, %c0_0] : memref<8x32xbf16, #tpu.memory_space<vmem>>, vector<8x32xbf16>
    %c0_1 = arith.constant 0 : index
    %c0_2 = arith.constant 0 : index
    %1 = vector.load %arg3[%c0_1, %c0_2] : memref<32x128xbf16, #tpu.memory_space<vmem>>, vector<32x128xbf16>
    %cst = arith.constant dense<0.000000e+00> : vector<8x128xf32>
    %2 = tpu.matmul %0, %1, %cst {dimension_numbers = #tpu.dot_dimension_numbers<[1], [0], [0], [1], [0, 0, 1, 1], [], []>} : vector<8x32xbf16>, vector<32x128xbf16>, vector<8x128xf32> -> vector<8x128xf32>
    %c0_3 = arith.constant 0 : index
    %c0_4 = arith.constant 0 : index
    %3 = vector.load %arg4[%c0_3, %c0_4] : memref<1x128xf32, #tpu.memory_space<vmem>>, vector<1x128xf32>
    %4 = vector.broadcast %3 : vector<1x128xf32> to vector<8x128xf32>
    %5 = arith.addf %2, %4 : vector<8x128xf32>
    %cst_5 = arith.constant 0.636619746 : f32
    %6 = math.sqrt %cst_5 : f32
    %cst_6 = arith.constant 5.000000e-01 : f32
    %7 = vector.broadcast %cst_6 : f32 to vector<8x128xf32>
    %8 = arith.mulf %7, %5 : vector<8x128xf32>
    %9 = arith.mulf %5, %5 : vector<8x128xf32>
    %10 = arith.mulf %9, %5 : vector<8x128xf32>
    %cst_7 = arith.constant 4.471500e-02 : f32
    %11 = vector.broadcast %cst_7 : f32 to vector<8x128xf32>
    %12 = arith.mulf %11, %10 : vector<8x128xf32>
    %13 = arith.addf %5, %12 : vector<8x128xf32>
    %14 = vector.broadcast %6 : f32 to vector<8x128xf32>
    %15 = arith.mulf %14, %13 : vector<8x128xf32>
    %16 = math.tanh %15 : vector<8x128xf32>
    %cst_8 = arith.constant 1.000000e+00 : f32
    %17 = vector.broadcast %cst_8 : f32 to vector<8x128xf32>
    %18 = arith.addf %17, %16 : vector<8x128xf32>
    %19 = arith.mulf %8, %18 : vector<8x128xf32>
    %20 = arith.truncf %19 : vector<8x128xf32> to vector<8x128xbf16>
    %c0_9 = arith.constant 0 : index
    %c0_10 = arith.constant 0 : index
    %21 = vector.load %arg5[%c0_9, %c0_10] : memref<128x32xbf16, #tpu.memory_space<vmem>>, vector<128x32xbf16>
    %cst_11 = arith.constant dense<0.000000e+00> : vector<8x32xf32>
    %22 = tpu.matmul %20, %21, %cst_11 {dimension_numbers = #tpu.dot_dimension_numbers<[1], [0], [0], [1], [0, 0, 1, 1], [], []>} : vector<8x128xbf16>, vector<128x32xbf16>, vector<8x32xf32> -> vector<8x32xf32>
    %c0_i32 = arith.constant 0 : i32
    %23 = arith.cmpi eq, %arg1, %c0_i32 : i32
    %24 = arith.extui %23 : i1 to i32
    %c0_i32_12 = arith.constant 0 : i32
    %25 = arith.cmpi ne, %24, %c0_i32_12 : i32
    scf.if %25 {
      %c0_17 = arith.constant 0 : index
      %c0_18 = arith.constant 0 : index
      %32 = vector.load %arg8[%c0_17, %c0_18] : memref<8x32xf32, #tpu.memory_space<vmem>>, vector<8x32xf32>
      tpu.vector_store %arg8[%c0_17, %c0_18], %22 {strides = array<i32>} : memref<8x32xf32, #tpu.memory_space<vmem>>, vector<8x32xf32>,
    } else {
    }
    %c0_i32_13 = arith.constant 0 : i32
    %26 = arith.cmpi sgt, %arg1, %c0_i32_13 : i32
    %27 = arith.extui %26 : i1 to i32
    %c0_i32_14 = arith.constant 0 : i32
    %28 = arith.cmpi ne, %27, %c0_i32_14 : i32
    scf.if %28 {
      %c0_17 = arith.constant 0 : index
      %c0_18 = arith.constant 0 : index
      %32 = vector.load %arg8[%c0_17, %c0_18] : memref<8x32xf32, #tpu.memory_space<vmem>>, vector<8x32xf32>
      %33 = arith.addf %32, %22 : vector<8x32xf32>
      %c0_19 = arith.constant 0 : index
      %c0_20 = arith.constant 0 : index
      %34 = vector.load %arg8[%c0_19, %c0_20] : memref<8x32xf32, #tpu.memory_space<vmem>>, vector<8x32xf32>
      tpu.vector_store %arg8[%c0_19, %c0_20], %33 {strides = array<i32>} : memref<8x32xf32, #tpu.memory_space<vmem>>, vector<8x32xf32>,
    } else {
    }
    %c0_i32_15 = arith.constant 0 : i32
    %29 = arith.cmpi eq, %arg1, %c0_i32_15 : i32
    %30 = arith.extui %29 : i1 to i32
    %c0_i32_16 = arith.constant 0 : i32
    %31 = arith.cmpi ne, %30, %c0_i32_16 : i32
    scf.if %31 {
      %c0_17 = arith.constant 0 : index
      %c0_18 = arith.constant 0 : index
      %32 = vector.load %arg8[%c0_17, %c0_18] : memref<8x32xf32, #tpu.memory_space<vmem>>, vector<8x32xf32>
      %c0_19 = arith.constant 0 : index
      %c0_20 = arith.constant 0 : index
      %33 = vector.load %arg6[%c0_19, %c0_20] : memref<1x32xf32, #tpu.memory_space<vmem>>, vector<1x32xf32>
      %34 = vector.broadcast %33 : vector<1x32xf32> to vector<8x32xf32>
      %35 = arith.addf %32, %34 : vector<8x32xf32>
      %c0_21 = arith.constant 0 : index
      %c0_22 = arith.constant 0 : index
      %36 = vector.load %arg7[%c0_21, %c0_22] : memref<8x32xf32, #tpu.memory_space<vmem>>, vector<8x32xf32>
      tpu.vector_store %arg7[%c0_21, %c0_22], %35 {strides = array<i32>} : memref<8x32xf32, #tpu.memory_space<vmem>>, vector<8x32xf32>,
    } else {
    }
    return
  }
  func.func @transform_0(%arg0: i32, %arg1: i32) -> (i32, i32) {
    %c0_i32 = arith.constant 0 : i32
    %c0_i32_0 = arith.constant 0 : i32
    return %arg0, %c0_i32 : i32, i32
  }
  func.func @transform_1(%arg0: i32, %arg1: i32) -> (i32, i32) {
    %c0_i32 = arith.constant 0 : i32
    %c0_i32_0 = arith.constant 0 : i32
    return %c0_i32, %arg1 : i32, i32
  }
  func.func @transform_2(%arg0: i32, %arg1: i32) -> (i32, i32) {
    %c0_i32 = arith.constant 0 : i32
    %c0_i32_0 = arith.constant 0 : i32
    return %c0_i32, %arg1 : i32, i32
  }
  func.func @transform_3(%arg0: i32, %arg1: i32) -> (i32, i32) {
    %c0_i32 = arith.constant 0 : i32
    %c0_i32_0 = arith.constant 0 : i32
    return %arg1, %c0_i32 : i32, i32
  }
  func.func @transform_4(%arg0: i32, %arg1: i32) -> (i32, i32) {
    %c0_i32 = arith.constant 0 : i32
    %c0_i32_0 = arith.constant 0 : i32
    %c0_i32_1 = arith.constant 0 : i32
    return %c0_i32, %c0_i32_0 : i32, i32
  }
  func.func @transform_5(%arg0: i32, %arg1: i32) -> (i32, i32) {
    %c0_i32 = arith.constant 0 : i32
    %c0_i32_0 = arith.constant 0 : i32
    return %arg0, %c0_i32 : i32, i32
  }
}

</mosaic_0001>

<llo_original>
// kernel: tpu_custom_call.1
$region0: #{tpu_custom_call.1}
  #allocation0 [shape = 'u32[]', space=smem, size = 0x4, offset = 0x4, fixed_abs, tag = 'smem constant byte address 0x4 - core index']
  #allocation1 [shape = 'u32[72,128]{1,0:T(1,128)}', space=vmem, size = 0x9000, scoped, tag = 'internal scratch']
  #allocation2 [shape = 'f32[8,32]{1,0:T(8,128)}', space=vmem, size = 0x1000, scoped, tag = 'scratch operand']
  %s0 = inlined_call_operand.vmem [shape: bf16[16,32], index: 0, kind: input, shape index: {}]
  %s1 = inlined_call_operand.vmem [shape: bf16[32,128], index: 1, kind: input, shape index: {}]
  %s2 = inlined_call_operand.vmem [shape: f32[1,128], index: 2, kind: input, shape index: {}]
  %s3 = inlined_call_operand.vmem [shape: bf16[128,32], index: 3, kind: input, shape index: {}]
  %s4 = inlined_call_operand.vmem [shape: f32[1,32], index: 4, kind: input, shape index: {}]
  %s5 = inlined_call_operand.hbm [shape: f32[16,32], index: 5, kind: output, shape index: {}]
  %s6 = sld [smem:[#allocation0]]
  $region65: #{tpu_custom_call.1} parent=0
    _
  %s8 = ssub.s32 1, %s6
  %s9 = scalar_select 0, %s8, %s6
  $region1: #{tpu_custom_call.1} parent=0
    #allocation3 [shape = 'u8[8192]{0}', space=vmem, size = 0x2000, scoped, tag = 'output window, operand 0']
    #allocation4 [shape = 's32[2]{0}', space=sflag, size = 0x8, scoped, tag = 'scoped memory for tpu_custom_call.1']
    %10 = vsyncpa [#allocation4], 0
    %s11 = scalar_lea.sflag [#allocation4], 1
    %12 = vsyncpa %s11, 0
    loop: start=0, step=1, limit=4
    $region2: #{tpu_custom_call.1} parent=1 // loop_pre_header
      _
    $region3: #{tpu_custom_call.1} parent=1 // loop_header
      %s14 = sphi 0, %s18
      %p15 = scmp.ge.s32.totalorder %s14, 4
      %s21 = sphi 0, %s33
      %s22 = sphi 0, %s29
      %s23 = sphi 0, %s21
      %s24 = sphi 0, %s22
      %s25 = sphi 0, %s23
      %s26 = sphi 0, %s24
      %s36 = sphi 0, %s38
      %s39 = sphi 0, %s36
      %s40 = sphi 0, %s39
      %s56 = sphi 0, %s40
      %s62 = sphi 0, %s64
      %s65 = sphi 0, %s62
      %s66 = sphi 0, %s65
      %s82 = sphi 0, %s66
      %s88 = sphi 0, %s90
      %s91 = sphi 0, %s88
      %s92 = sphi 0, %s91
      %s108 = sphi 0, %s92
      %s114 = sphi 0, %s116
      %s117 = sphi 0, %s114
      %s118 = sphi 0, %s117
      %s134 = sphi 0, %s118
      %s138 = sphi 0, %s138
      %s140 = sphi 0, %s138
      %s141 = sphi 0, %s140
      %s155 = sphi 0, %s141
      %s161 = sphi 0, %s163
      %s164 = sphi 0, %s161
      %s165 = sphi 0, %s164
      %s181 = sphi 0, %s165
    $region4: #{tpu_custom_call.1} parent=1 // loop_header_branch
      %17 = sbr.rel (%p15) target = $region8
    $region5: #{tpu_custom_call.1} parent=1 // loop_body
      %s19 = ssub.s32 %s14, 1
      %s20 = ssub.s32 %s14, 2
      %s27 = sadd.s32 1, %s22
      %p28 = scmp.ge.s32.totalorder %s27, 1
      %s29 = scalar_select %p28, 0, %s27
      %s30 = sadd.s32 1, %s21
      %s31 = scalar_select %p28, %s30, %s21
      %p32 = scmp.ge.s32.totalorder %s31, 2
      %s33 = scalar_select %p32, 0, %s31
      %s34 = ssub.s32 %s21, %s33
      %p35 = scmp.eq.s32.totalorder %s34, 0
      %s37 = sadd.s32 %s36, 1
      %s38 = scalar_select %p35, %s36, %s37
      %p41 = pneg %p35
      %p42 = scmp.eq.s32.totalorder %s14, 1
      %p43 = por %p41, %p42
      %p44 = scmp.ne.s32.totalorder %s36, %s39
      %p45 = scmp.eq.s32.totalorder %s14, 0
      %p46 = por %p44, %p45
      %p47 = scmp.ne.s32.totalorder %s36, %s39
      %p48 = scmp.eq.s32.totalorder %s19, 1
      %p49 = por %p47, %p48
      %p50 = scmp.ne.s32.totalorder %s39, %s40
      %p51 = scmp.eq.s32.totalorder %s19, 0
      %p52 = por %p50, %p51
      %p53 = scmp.ne.s32.totalorder %s39, %s40
      %p54 = scmp.eq.s32.totalorder %s20, 1
      %p55 = por %p53, %p54
      %p57 = scmp.ne.s32.totalorder %s40, %s56
      %p58 = scmp.eq.s32.totalorder %s20, 0
      %p59 = por %p57, %p58
      %s60 = ssub.s32 %s22, %s29
      %p61 = scmp.eq.s32.totalorder %s60, 0
      %s63 = sadd.s32 %s62, 1
      %s64 = scalar_select %p61, %s62, %s63
      %p67 = pneg %p61
      %p68 = scmp.eq.s32.totalorder %s14, 1
      %p69 = por %p67, %p68
      %p70 = scmp.ne.s32.totalorder %s62, %s65
      %p71 = scmp.eq.s32.totalorder %s14, 0
      %p72 = por %p70, %p71
      %p73 = scmp.ne.s32.totalorder %s62, %s65
      %p74 = scmp.eq.s32.totalorder %s19, 1
      %p75 = por %p73, %p74
      %p76 = scmp.ne.s32.totalorder %s65, %s66
      %p77 = scmp.eq.s32.totalorder %s19, 0
      %p78 = por %p76, %p77
      %p79 = scmp.ne.s32.totalorder %s65, %s66
      %p80 = scmp.eq.s32.totalorder %s20, 1
      %p81 = por %p79, %p80
      %p83 = scmp.ne.s32.totalorder %s66, %s82
      %p84 = scmp.eq.s32.totalorder %s20, 0
      %p85 = por %p83, %p84
      %s86 = ssub.s32 %s22, %s29
      %p87 = scmp.eq.s32.totalorder %s86, 0
      %s89 = sadd.s32 %s88, 1
      %s90 = scalar_select %p87, %s88, %s89
      %p93 = pneg %p87
      %p94 = scmp.eq.s32.totalorder %s14, 1
      %p95 = por %p93, %p94
      %p96 = scmp.ne.s32.totalorder %s88, %s91
      %p97 = scmp.eq.s32.totalorder %s14, 0
      %p98 = por %p96, %p97
      %p99 = scmp.ne.s32.totalorder %s88, %s91
      %p100 = scmp.eq.s32.totalorder %s19, 1
      %p101 = por %p99, %p100
      %p102 = scmp.ne.s32.totalorder %s91, %s92
      %p103 = scmp.eq.s32.totalorder %s19, 0
      %p104 = por %p102, %p103
      %p105 = scmp.ne.s32.totalorder %s91, %s92
      %p106 = scmp.eq.s32.totalorder %s20, 1
      %p107 = por %p105, %p106
      %p109 = scmp.ne.s32.totalorder %s92, %s108
      %p110 = scmp.eq.s32.totalorder %s20, 0
      %p111 = por %p109, %p110
      %s112 = ssub.s32 %s22, %s29
      %p113 = scmp.eq.s32.totalorder %s112, 0
      %s115 = sadd.s32 %s114, 1
      %s116 = scalar_select %p113, %s114, %s115
      %p119 = pneg %p113
      %p120 = scmp.eq.s32.totalorder %s14, 1
      %p121 = por %p119, %p120
      %p122 = scmp.ne.s32.totalorder %s114, %s117
      %p123 = scmp.eq.s32.totalorder %s14, 0
      %p124 = por %p122, %p123
      %p125 = scmp.ne.s32.totalorder %s114, %s117
      %p126 = scmp.eq.s32.totalorder %s19, 1
      %p127 = por %p125, %p126
      %p128 = scmp.ne.s32.totalorder %s117, %s118
      %p129 = scmp.eq.s32.totalorder %s19, 0
      %p130 = por %p128, %p129
      %p131 = scmp.ne.s32.totalorder %s117, %s118
      %p132 = scmp.eq.s32.totalorder %s20, 1
      %p133 = por %p131, %p132
      %p135 = scmp.ne.s32.totalorder %s118, %s134
      %p136 = scmp.eq.s32.totalorder %s20, 0
      %p137 = por %p135, %p136
      %s139 = sadd.s32 %s138, 1
      %p142 = scmp.eq.s32.totalorder %s14, 1
      %p143 = scmp.ne.s32.totalorder %s138, %s140
      %p144 = scmp.eq.s32.totalorder %s14, 0
      %p145 = por %p143, %p144
      %p146 = scmp.ne.s32.totalorder %s138, %s140
      %p147 = scmp.eq.s32.totalorder %s19, 1
      %p148 = por %p146, %p147
      %p149 = scmp.ne.s32.totalorder %s140, %s141
      %p150 = scmp.eq.s32.totalorder %s19, 0
      %p151 = por %p149, %p150
      %p152 = scmp.ne.s32.totalorder %s140, %s141
      %p153 = scmp.eq.s32.totalorder %s20, 1
      %p154 = por %p152, %p153
      %p156 = scmp.ne.s32.totalorder %s141, %s155
      %p157 = scmp.eq.s32.totalorder %s20, 0
      %p158 = por %p156, %p157
      %s159 = ssub.s32 %s21, %s33
      %p160 = scmp.eq.s32.totalorder %s159, 0
      %s162 = sadd.s32 %s161, 1
      %s163 = scalar_select %p160, %s161, %s162
      %p166 = pneg %p160
      %p167 = scmp.eq.s32.totalorder %s14, 1
      %p168 = por %p166, %p167
      %p169 = scmp.ne.s32.totalorder %s161, %s164
      %p170 = scmp.eq.s32.totalorder %s14, 0
      %p171 = por %p169, %p170
      %p172 = scmp.ne.s32.totalorder %s161, %s164
      %p173 = scmp.eq.s32.totalorder %s19, 1
      %p174 = por %p172, %p173
      %p175 = scmp.ne.s32.totalorder %s164, %s165
      %p176 = scmp.eq.s32.totalorder %s19, 0
      %p177 = por %p175, %p176
      %p178 = scmp.ne.s32.totalorder %s164, %s165
      %p179 = scmp.eq.s32.totalorder %s20, 1
      %p180 = por %p178, %p179
      %p182 = scmp.ne.s32.totalorder %s165, %s181
      %p183 = scmp.eq.s32.totalorder %s20, 0
      %p184 = por %p182, %p183
      %p185 = scmp.le.s32.totalorder 1, %s14
      %p186 = scmp.lt.s32.totalorder %s14, 3
      %p187 = pnand %p185, %p186
      %p188 = pneg %p187
      // Predicated region
      $region9: #{tpu_custom_call.1} parent=5 // pred_check
        _
      $region10: #{tpu_custom_call.1} parent=5 // pred_check_branch
        %190 = sbr.rel (%p187) target = $region12
      $region11: #{tpu_custom_call.1} parent=5 // pred_region
        %s191 = ssub.s32 %s14, 1
        // Predicated region
        $region13: #{tpu_custom_call.1} parent=11 // pred_check
          %p192 = pneg %p78
        $region14: #{tpu_custom_call.1} parent=11 // pred_check_branch
          %194 = sbr.rel (%p192) target = $region16
        $region15: #{tpu_custom_call.1} parent=11 // pred_region
          %p195 = scmp.lt.s32.totalorder %s24, 0
          %s196 = scalar_select %p195, %s24, 0
          %s197 = smul.addr %s196, 4
          %s198 = scalar_lea.vmem %s1, %s197
        $region16: #{tpu_custom_call.1} parent=11 // pred_fallthru
          _
        // Predicated region
        $region17: #{tpu_custom_call.1} parent=11 // pred_check
          %p199 = pneg %p104
        $region18: #{tpu_custom_call.1} parent=11 // pred_check_branch
          %201 = sbr.rel (%p199) target = $region20
        $region19: #{tpu_custom_call.1} parent=11 // pred_region
          %p202 = scmp.lt.s32.totalorder %s24, 0
          %s203 = scalar_select %p202, %s24, 0
          %s204 = scalar_lea.vmem %s2, %s203
        $region20: #{tpu_custom_call.1} parent=11 // pred_fallthru
          _
        // Predicated region
        $region21: #{tpu_custom_call.1} parent=11 // pred_check
          %p205 = pneg %p130
        $region22: #{tpu_custom_call.1} parent=11 // pred_check_branch
          %207 = sbr.rel (%p205) target = $region24
        $region23: #{tpu_custom_call.1} parent=11 // pred_region
          %s208 = smul.u32 16, %s24
          %p209 = scmp.lt.s32.totalorder %s208, 15
          %s210 = scalar_select %p209, %s208, 15
          %s211 = smul.addr %s210, 4
          %s212 = scalar_lea.vmem %s3, %s211
          %s213 = smul.u32 16, %s24
        $region24: #{tpu_custom_call.1} parent=11 // pred_fallthru
          _
        // Predicated region
        $region25: #{tpu_custom_call.1} parent=11 // pred_check
          %p214 = pneg %p151
        $region26: #{tpu_custom_call.1} parent=11 // pred_check_branch
          %216 = sbr.rel (%p214) target = $region28
        $region27: #{tpu_custom_call.1} parent=11 // pred_region
          _
        $region28: #{tpu_custom_call.1} parent=11 // pred_fallthru
          _
      $region12: #{tpu_custom_call.1} parent=5 // pred_fallthru
        _
      %p217 = scmp.lt.s32.totalorder %s14, 2
      // Predicated region
      $region29: #{tpu_custom_call.1} parent=5 // pred_check
        %p218 = pneg %p217
      $region30: #{tpu_custom_call.1} parent=5 // pred_check_branch
        %220 = sbr.rel (%p218) target = $region32
      $region31: #{tpu_custom_call.1} parent=5 // pred_region
        // Predicated region
        $region33: #{tpu_custom_call.1} parent=31 // pred_check
          %p221 = pneg %p46
        $region34: #{tpu_custom_call.1} parent=31 // pred_check_branch
          %223 = sbr.rel (%p221) target = $region36
        $region35: #{tpu_custom_call.1} parent=31 // pred_region
          %p224 = scmp.lt.s32.totalorder %s21, 1
          %s225 = scalar_select %p224, %s21, 1
          %s226 = smul.addr %s225, 4
          %s227 = scalar_lea.vmem %s0, %s226
        $region36: #{tpu_custom_call.1} parent=31 // pred_fallthru
          _
      $region32: #{tpu_custom_call.1} parent=5 // pred_fallthru
        _
      %p228 = scmp.le.s32.totalorder 1, %s14
      %p229 = scmp.lt.s32.totalorder %s14, 3
      %p230 = pnand %p228, %p229
      %p231 = pneg %p230
      // Predicated region
      $region37: #{tpu_custom_call.1} parent=5 // pred_check
        _
      $region38: #{tpu_custom_call.1} parent=5 // pred_check_branch
        %233 = sbr.rel (%p230) target = $region40
      $region39: #{tpu_custom_call.1} parent=5 // pred_region
        %s234 = ssub.s32 %s14, 1
        %p235 = scmp.lt.s32.totalorder %s23, 1
        %s236 = scalar_select %p235, %s23, 1
        %s237 = smul.addr %s236, 4
        %s238 = scalar_lea.vmem %s0, %s237
        %p239 = pneg %p52
        %p240 = pneg %p49
        %p241 = scmp.lt.s32.totalorder %s24, 0
        %s242 = scalar_select %p241, %s24, 0
        %s243 = smul.addr %s242, 4
        %s244 = scalar_lea.vmem %s1, %s243
        %p245 = pneg %p78
        %p246 = pneg %p75
        %p247 = scmp.lt.s32.totalorder %s24, 0
        %s248 = scalar_select %p247, %s24, 0
        %s249 = scalar_lea.vmem %s2, %s248
        %p250 = pneg %p104
        %p251 = pneg %p101
        %s252 = smul.u32 16, %s24
        %p253 = scmp.lt.s32.totalorder %s252, 15
        %s254 = scalar_select %p253, %s252, 15
        %s255 = smul.addr %s254, 4
        %s256 = scalar_lea.vmem %s3, %s255
        %p257 = pneg %p130
        %p258 = pneg %p127
        %p259 = pneg %p151
        %p260 = pneg %p148
        %p261 = pneg %p177
        %p262 = pneg %p174
        %s263 = sand.u32 %s164, 1
        %s264 = scalar_lea.sflag [#allocation4], %s263
        %s265 = sand.u32 %s164, 1
        %s266 = smul.addr %s265, 8
        %s267 = scalar_lea.vmem [#allocation3], %s266
        %p268 = scmp.lt.s32.totalorder %s23, 1
        %s269 = scalar_select %p268, %s23, 1
        %s270 = smul.addr %s269, 4
        %s271 = scalar_lea.vmem %s0, %s270
        %p272 = scmp.lt.s32.totalorder %s24, 0
        %s273 = scalar_select %p272, %s24, 0
        %s274 = smul.addr %s273, 4
        %s275 = scalar_lea.vmem %s1, %s274
        %p276 = scmp.lt.s32.totalorder %s24, 0
        %s277 = scalar_select %p276, %s24, 0
        %s278 = scalar_lea.vmem %s2, %s277
        %s279 = smul.u32 16, %s24
        %p280 = scmp.lt.s32.totalorder %s279, 15
        %s281 = scalar_select %p280, %s279, 15
        %s282 = smul.addr %s281, 4
        %s283 = scalar_lea.vmem %s3, %s282
        %s284 = smul.u32 16, %s24
        %v286 = vld [vmem:[%s271] sm:$0xf]
        %v287 = vld [vmem:[%s275] sm:$0xf]
        %v288 = vld [vmem:[%s275 + $0x4] sm:$0xf]
        %v289 = vld [vmem:[%s275 + $0x8] sm:$0xf]
        %v290 = vld [vmem:[%s275 + $0xc] sm:$0xf]
        %v291 = vld [vmem:[%s278] sm:$0x1]
        %v293 = vperm.slane %v291, 0
        %v299 = vunpack.c.l.b16 %v287
        %v300 = vunpack.c.l.b16 %v288
        %v301 = vunpack.c.l.b16 %v289
        %v302 = vunpack.c.l.b16 %v290
        %v303 = vpack.c.b16 %v300, %v299
        %v304 = vpack.c.b16 %v302, %v301
        %vm307 = vcmask 261120
        %v309 = vsel %vm307, %v286, 0
        %311 = vmatpush.bf16.msra.mxu0 0
        %312 = vmatpush.bf16.msra.mxu0 0
        %313 = vmatpush.bf16.msra.mxu0 0
        %314 = vmatpush.bf16.msra.mxu0 0
        %315 = vmatpush.bf16.msra.mxu0 0
        %316 = vmatpush.bf16.msra.mxu0 0
        %317 = vmatpush.bf16.msra.mxu0 %v304
        %318 = vmatpush.bf16.msra.mxu0 %v303
        %319 = vmatmul.bf16.gmra.mxu0 %v309
        %v320 = vpop.f32.mrf.mxu0
        %v321 = vadd.f32 %v293, %v320
        %v322 = vpop.f32.mrf.mxu0
        %323 = vdwg.mxu0
        %v324 = vmul.f32 %v321, 0.5
        %v325 = vmul.f32 %v321, %v321
        %v326 = vmul.f32 %v325, %v321
        %v327 = vmul.f32 %v326, 0.044715
        %v328 = vadd.f32 %v321, %v327
        %v329 = vmul.f32 %v328, 0.7978845
        %v330 = vtanh.pop %v329
        %v331 = vadd.f32 %v330, 1.0
        %v332 = vmul.f32 %v324, %v331
        %v333 = vpack.c.bf16 %v332, %v332
        %v334 = vld [vmem:[%s283] sm:$0xf]
        %v335 = vld [vmem:[%s283 + $0x4] sm:$0xf]
        %v336 = vld [vmem:[%s283 + $0x8] sm:$0xf]
        %v337 = vld [vmem:[%s283 + $0xc] sm:$0xf]
        %v338 = vld [vmem:[%s283 + $0x10] sm:$0xf]
        %v339 = vld [vmem:[%s283 + $0x14] sm:$0xf]
        %v340 = vld [vmem:[%s283 + $0x18] sm:$0xf]
        %v341 = vld [vmem:[%s283 + $0x1c] sm:$0xf]
        %v342 = vld [vmem:[%s283 + $0x20] sm:$0xf]
        %v343 = vld [vmem:[%s283 + $0x24] sm:$0xf]
        %v344 = vld [vmem:[%s283 + $0x28] sm:$0xf]
        %v345 = vld [vmem:[%s283 + $0x2c] sm:$0xf]
        %v346 = vld [vmem:[%s283 + $0x30] sm:$0xf]
        %v347 = vld [vmem:[%s283 + $0x34] sm:$0xf]
        %v348 = vld [vmem:[%s283 + $0x38] sm:$0xf]
        %v349 = vld [vmem:[%s283 + $0x3c] sm:$0xf]
        %v366 = vunpack.c.l.b16 %v334
        %v367 = vunpack.c.l.b16 %v335
        %v368 = vunpack.c.l.b16 %v336
        %v369 = vunpack.c.l.b16 %v337
        %v370 = vunpack.c.l.b16 %v338
        %v371 = vunpack.c.l.b16 %v339
        %v372 = vunpack.c.l.b16 %v340
        %v373 = vunpack.c.l.b16 %v341
        %v374 = vunpack.c.l.b16 %v342
        %v375 = vunpack.c.l.b16 %v343
        %v376 = vunpack.c.l.b16 %v344
        %v377 = vunpack.c.l.b16 %v345
        %v378 = vunpack.c.l.b16 %v346
        %v379 = vunpack.c.l.b16 %v347
        %v380 = vunpack.c.l.b16 %v348
        %v381 = vunpack.c.l.b16 %v349
        %v382 = vpack.c.b16 %v367, %v366
        %v383 = vpack.c.b16 %v369, %v368
        %v384 = vpack.c.b16 %v371, %v370
        %v385 = vpack.c.b16 %v373, %v372
        %v386 = vpack.c.b16 %v375, %v374
        %v387 = vpack.c.b16 %v377, %v376
        %v388 = vpack.c.b16 %v379, %v378
        %v389 = vpack.c.b16 %v381, %v380
        %398 = vmatpush.bf16.msra.mxu0 %v389
        %399 = vmatpush.bf16.msra.mxu0 %v388
        %400 = vmatpush.bf16.msra.mxu0 %v387
        %401 = vmatpush.bf16.msra.mxu0 %v386
        %402 = vmatpush.bf16.msra.mxu0 %v385
        %403 = vmatpush.bf16.msra.mxu0 %v384
        %404 = vmatpush.bf16.msra.mxu0 %v383
        %405 = vmatpush.bf16.msra.mxu0 %v382
        %406 = vmatmul.bf16.gmra.mxu0 %v333
        %v407 = vpop.f32.mrf.mxu0
        %v408 = vadd.f32 0.0, %v407
        %v409 = vpop.f32.mrf.mxu0
        %410 = vdwg.mxu0
        %p411 = scmp.eq.s32.totalorder %s24, 0
        // Predicated region
        $region41: #{tpu_custom_call.1} parent=39 // pred_check
          %p412 = pneg %p411
        $region42: #{tpu_custom_call.1} parent=39 // pred_check_branch
          %414 = sbr.rel (%p412) target = $region44
        $region43: #{tpu_custom_call.1} parent=39 // pred_region
          %415 = vst.msk [vmem:[#allocation2] sm:$0xff] %vm307, %v408
        $region44: #{tpu_custom_call.1} parent=39 // pred_fallthru
          _
        %p416 = scmp.gt.s32.totalorder %s24, 0
        // Predicated region
        $region45: #{tpu_custom_call.1} parent=39 // pred_check
          %p417 = pneg %p416
        $region46: #{tpu_custom_call.1} parent=39 // pred_check_branch
          %419 = sbr.rel (%p417) target = $region48
        $region47: #{tpu_custom_call.1} parent=39 // pred_region
          %v420 = vld [vmem:[#allocation2] sm:$0xff]
          %v421 = vadd.f32 %v420, %v408
          %422 = vst.msk [vmem:[#allocation2] sm:$0xff] %vm307, %v421
        $region48: #{tpu_custom_call.1} parent=39 // pred_fallthru
          _
        // Predicated region
        $region49: #{tpu_custom_call.1} parent=39 // pred_check
          %p423 = pneg %p411
        $region50: #{tpu_custom_call.1} parent=39 // pred_check_branch
          %425 = sbr.rel (%p423) target = $region52
        $region51: #{tpu_custom_call.1} parent=39 // pred_region
          %v426 = vld [vmem:[#allocation2] sm:$0xff]
          %v427 = vld [vmem:[%s4] sm:$0x1]
          %v429 = vperm.slane %v427, 0
          %v431 = vadd.f32 %v426, %v429
          %432 = vst.msk [vmem:[%s267] sm:$0xff] %vm307, %v431
        $region52: #{tpu_custom_call.1} parent=39 // pred_fallthru
          _
        %s433 = sand.u32 %s164, 1
        %s434 = scalar_lea.sflag [#allocation4], %s433
        %s435 = sand.u32 %s164, 1
        %s436 = smul.addr %s435, 8
        %s437 = scalar_lea.vmem [#allocation3], %s436
        // Predicated region
        $region53: #{tpu_custom_call.1} parent=39 // pred_check
          %p438 = pneg %p174
        $region54: #{tpu_custom_call.1} parent=39 // pred_check_branch
          %440 = sbr.rel (%p438) target = $region56
        $region55: #{tpu_custom_call.1} parent=39 // pred_region
          %442 = vsyncadd %s434, 0
          %s443 = smul.addr %s23, 8
          %s444 = scalar_lea.hbm %s5, %s443
          %s446 = sshll.u32 %s437, 4
          %s447 = int_to_ptr.vmem [resolvable:$true] %s446
          %s448 = sshll.u32 %s444, 4
          %s449 = int_to_ptr.hbm [resolvable:$true] %s448
          %451 = dma.vmem_to_hbm [thread:$0]  %s447, 128, %s449, %s434
        $region56: #{tpu_custom_call.1} parent=39 // pred_fallthru
          _
      $region40: #{tpu_custom_call.1} parent=5 // pred_fallthru
        _
      %p452 = scmp.le.s32.totalorder 2, %s14
      // Predicated region
      $region57: #{tpu_custom_call.1} parent=5 // pred_check
        %p453 = pneg %p452
      $region58: #{tpu_custom_call.1} parent=5 // pred_check_branch
        %455 = sbr.rel (%p453) target = $region60
      $region59: #{tpu_custom_call.1} parent=5 // pred_region
        %s456 = ssub.s32 %s14, 2
        // Predicated region
        $region61: #{tpu_custom_call.1} parent=59 // pred_check
          %p457 = pneg %p180
        $region62: #{tpu_custom_call.1} parent=59 // pred_check_branch
          %459 = sbr.rel (%p457) target = $region64
        $region63: #{tpu_custom_call.1} parent=59 // pred_region
          %s460 = sand.u32 %s165, 1
          %s461 = scalar_lea.sflag [#allocation4], %s460
          %s462 = sand.u32 %s165, 1
          %s463 = smul.addr %s462, 8
          %s464 = scalar_lea.vmem [#allocation3], %s463
          %466 = dma.done %s461, 128
        $region64: #{tpu_custom_call.1} parent=59 // pred_fallthru
          _
      $region60: #{tpu_custom_call.1} parent=5 // pred_fallthru
        _
    $region6: #{tpu_custom_call.1} parent=1 // loop_footer
      %s18 = sadd.s32 1, %s14
    $region7: #{tpu_custom_call.1} parent=1 // loop_footer_branch
      %13 = sbr.rel target = $region3
    $region8: #{tpu_custom_call.1} parent=1 // loop_exit
      _
    %467 = vsyncpa [#allocation4], 1
    %s468 = scalar_lea.sflag [#allocation4], 1
    %469 = vsyncpa %s468, 1

</llo_original>
